<compile_context>
chip_gen: v6e
topology: v6e:2x2x1
jax: 0.10.0
libtpu: 0.0.40
codegen_flags: <defaults>
</compile_context>

<pallas_src>
import functools

import jax
import jax.numpy as jnp
from jax import lax
from jax.experimental import pallas as pl
from jax.experimental.pallas import tpu as pltpu

_SQRT2 = 1.41421                      # matches the PyTorch constant exactly
_INV_SQRT2 = float(1.0 / _SQRT2)      # trace-time reciprocal (<=1 ulp diff)
_LANES = 128


def _cdiv(a: int, b: int) -> int:
    return -(-a // b)


def _round_up(a: int, m: int) -> int:
    return _cdiv(a, m) * m


def _fused_gelu_kernel(x_ref, o_ref):
    x = x_ref[...]
    # Compute in f32 (important for bf16 inputs on v5e where the VPU/EUP
    # have no bf16 path), cast back to the output dtype.
    xf = x.astype(jnp.float32)
    y = xf * 0.5 * (1.0 + lax.erf(xf * _INV_SQRT2))
    o_ref[...] = y.astype(o_ref.dtype)


def _gelu_2d(x2d: jax.Array, rows_per_block: int) -> jax.Array:
    """Run the kernel on a lane-dense (rows, 128) slab."""
    rows, lanes = x2d.shape
    dtype = x2d.dtype
    itemsize = jnp.dtype(dtype).itemsize

    # Native packed sublane count per dtype width (keeps stores unmasked
    # and avoids relayouts for sub-32-bit dtypes).
    sub = {4: 8, 2: 16, 1: 32}.get(itemsize, 8)

    # Large block (multiple of `sub`), but never much bigger than the array.
    blk = min(rows_per_block, _round_up(rows, sub))
    # For big inputs keep >= ~8 grid iterations so v7x's two TensorCores
    # both get work on the "parallel" axis.
    if rows > 8 * sub:
        blk = min(blk, _round_up(_cdiv(rows, 8), sub))
    blk = max(blk, sub)

    grid = (_cdiv(rows, blk),)

    n_elems = rows * lanes
    cost = pl.CostEstimate(
        flops=10 * n_elems,            # mul/add around the erf
        transcendentals=n_elems,       # one erf per element
        bytes_accessed=2 * n_elems * itemsize,
    )

    return pl.pallas_call(
        _fused_gelu_kernel,
        out_shape=jax.ShapeDtypeStruct((rows, lanes), dtype),
        grid_spec=pltpu.PrefetchScalarGridSpec(
            num_scalar_prefetch=0,
            grid=grid,
            in_specs=[pl.BlockSpec((blk, lanes), lambda i: (i, 0))],
            out_specs=pl.BlockSpec((blk, lanes), lambda i: (i, 0)),
        ),
        compiler_params=pltpu.CompilerParams(
            dimension_semantics=("parallel",),
        ),
        cost_estimate=cost,
    )(x2d)


@functools.partial(jax.jit, static_argnames=("rows_per_block",))
def fused_gelu(x: jax.Array, *, rows_per_block: int = 4096) -> jax.Array:
    """Elementwise erf-GELU (PyTorch FusedGELUModule) via a Pallas TPU kernel."""
    orig_shape = x.shape
    n = x.size
    if n == 0:
        return x

    flat = x.reshape(-1)

    if n % _LANES == 0:
        # Common, copy-free path: reshape is free, no padding, no slicing.
        rows = n // _LANES
        out2d = _gelu_2d(flat.reshape(rows, _LANES), rows_per_block)
        return out2d.reshape(orig_shape)

    # Ragged fallback: pad only the sub-128-element tail so the slab is
    # lane-dense, then strip it on the way out.
    n_pad = _round_up(n, _LANES)
    flat_p = jnp.pad(flat, (0, n_pad - n))
    out2d = _gelu_2d(flat_p.reshape(n_pad // _LANES, _LANES), rows_per_block)
    return out2d.reshape(-1)[:n].reshape(orig_shape)


def _reference_fused_gelu(x: jax.Array) -> jax.Array:
    xf = x.astype(jnp.float32)
    return (xf * 0.5 * (1.0 + lax.erf(xf * _INV_SQRT2))).astype(x.dtype)


if __name__ == "__main__":
    key = jax.random.PRNGKey(0)

    # Main example: small NCHW-style activation tensor (aligned path).
    x = jax.random.normal(key, (2, 4, 16, 16), dtype=jnp.float32)
    y = jax.block_until_ready(fused_gelu(x))
    y_ref = _reference_fused_gelu(x)
    assert y.shape == x.shape and y.dtype == x.dtype
    assert jnp.allclose(y, y_ref, atol=1e-6, rtol=1e-6), "f32 mismatch vs reference"

    # Ragged path (element count not a multiple of 128).
    k1, k2 = jax.random.split(key)
    x_odd = jax.random.normal(k1, (3, 5, 7), dtype=jnp.float32)
    y_odd = jax.block_until_ready(fused_gelu(x_odd))
    assert jnp.allclose(y_odd, _reference_fused_gelu(x_odd), atol=1e-6, rtol=1e-6), \
        "ragged mismatch vs reference"

    # bf16 path (dtype-aware sublane granularity, f32 compute inside).
    x_bf = jax.random.normal(k2, (2, 8, 32), dtype=jnp.bfloat16)
    y_bf = jax.block_until_ready(fused_gelu(x_bf))
    assert y_bf.dtype == jnp.bfloat16
    assert jnp.allclose(y_bf.astype(jnp.float32),
                        _reference_fused_gelu(x_bf).astype(jnp.float32),
                        atol=1e-2, rtol=1e-2), "bf16 mismatch vs reference"

    print("KERNEL_OK")
</pallas_src>

<mosaic_0001>
module attributes {stable_mosaic.version = 11 : i64} {
  func.func @_fused_gelu_kernel(%arg0: i32, %arg1: memref<16x128xf32, #tpu.memory_space<vmem>>, %arg2: memref<16x128xf32, #tpu.memory_space<vmem>>) attributes {dimension_semantics = [#tpu.dimension_semantics<parallel>], iteration_bounds = array<i64: 1>, scalar_prefetch = 0 : i64, scratch_operands = 0 : i64, tpu.core_type = #tpu.core_type<tc>, window_params = [{transform_indices = @transform_0, window_bounds = array<i64: 16, 128>}, {transform_indices = @transform_1, window_bounds = array<i64: 16, 128>}]} {
    %c0 = arith.constant 0 : index
    %c0_0 = arith.constant 0 : index
    %0 = vector.load %arg1[%c0, %c0_0] : memref<16x128xf32, #tpu.memory_space<vmem>>, vector<16x128xf32>
    %cst = arith.constant 5.000000e-01 : f32
    %1 = vector.broadcast %cst : f32 to vector<16x128xf32>
    %2 = arith.mulf %0, %1 : vector<16x128xf32>
    %cst_1 = arith.constant 0.707108557 : f32
    %3 = vector.broadcast %cst_1 : f32 to vector<16x128xf32>
    %4 = arith.mulf %0, %3 : vector<16x128xf32>
    %5 = math.erf %4 : vector<16x128xf32>
    %cst_2 = arith.constant 1.000000e+00 : f32
    %6 = vector.broadcast %cst_2 : f32 to vector<16x128xf32>
    %7 = arith.addf %6, %5 : vector<16x128xf32>
    %8 = arith.mulf %2, %7 : vector<16x128xf32>
    %c0_3 = arith.constant 0 : index
    %c0_4 = arith.constant 0 : index
    %9 = vector.load %arg2[%c0_3, %c0_4] : memref<16x128xf32, #tpu.memory_space<vmem>>, vector<16x128xf32>
    tpu.vector_store %arg2[%c0_3, %c0_4], %8 {strides = array<i32>} : memref<16x128xf32, #tpu.memory_space<vmem>>, vector<16x128xf32>,
    return
  }
  func.func @transform_0(%arg0: i32) -> (i32, i32) {
    %c0_i32 = arith.constant 0 : i32
    %c0_i32_0 = arith.constant 0 : i32
    return %arg0, %c0_i32 : i32, i32
  }
  func.func @transform_1(%arg0: i32) -> (i32, i32) {
    %c0_i32 = arith.constant 0 : i32
    %c0_i32_0 = arith.constant 0 : i32
    return %arg0, %c0_i32 : i32, i32
  }
}

</mosaic_0001>

<llo_original>
// kernel: fused_gelu.1
$region0: #{fused_gelu.1}
  #allocation0 [shape = 'u32[]', space=smem, size = 0x4, offset = 0x4, fixed_abs, tag = 'smem constant byte address 0x4 - core index']
  #allocation1 [shape = 'u32[144,128]{1,0:T(1,128)}', space=vmem, size = 0x12000, scoped, tag = 'internal scratch']
  %s0 = inlined_call_operand.vmem [shape: f32[16,128], index: 0, kind: input, shape index: {}]
  %s1 = inlined_call_operand.vmem [shape: f32[16,128], index: 1, kind: output, shape index: {}]
  %s2 = sld [smem:[#allocation0]]
  $region14: #{fused_gelu.1} parent=0
    _
  %s4 = ssub.s32 1, %s2
  %s5 = scalar_select 0, %s4, %s2
  // Predicated region
  $region2: #{fused_gelu.1} parent=0 // pred_check
    _
  $region3: #{fused_gelu.1} parent=0 // pred_check_branch
    %7 = sbr.rel (0) target = $region5
  $region4: #{fused_gelu.1} parent=0 // pred_region
    _
  $region5: #{fused_gelu.1} parent=0 // pred_fallthru
    _
  %v8 = vld [vmem:[%s0] sm:$0xff]
  %v9 = vld [vmem:[%s0 + $0x8] sm:$0xff]
  %v10 = vmul.f32 %v8, 0.5
  %v11 = vmul.f32 %v9, 0.5
  %v12 = vmul.f32 %v8, 0.70710856
  %v13 = vmul.f32 %v9, 0.70710856
  %v14 = verf.f32.pop %v12
  %v15 = verf.f32.pop %v13
  %v16 = vadd.f32 %v14, 1.0
  %v17 = vadd.f32 %v15, 1.0
  %v18 = vmul.f32 %v10, %v16
  %v19 = vmul.f32 %v11, %v17
  %20 = vst [vmem:[%s1] sm:$0xff] %v18
  %21 = vst [vmem:[%s1 + $0x8] sm:$0xff] %v19
  // Predicated region
  $region6: #{fused_gelu.1} parent=0 // pred_check
    _
  $region7: #{fused_gelu.1} parent=0 // pred_check_branch
    %23 = sbr.rel (0) target = $region9
  $region8: #{fused_gelu.1} parent=0 // pred_region
    _
  $region9: #{fused_gelu.1} parent=0 // pred_fallthru
    _
  // Predicated region
  $region10: #{fused_gelu.1} parent=0 // pred_check
    _
  $region11: #{fused_gelu.1} parent=0 // pred_check_branch
    %25 = sbr.rel (0) target = $region13
  $region12: #{fused_gelu.1} parent=0 // pred_region
    _
  $region13: #{fused_gelu.1} parent=0 // pred_fallthru
    _

</llo_original>
